<compile_context>
chip_gen: v6e
topology: v6e:2x2x1
jax: 0.10.0
libtpu: 0.0.40
codegen_flags: <defaults>
</compile_context>

<pallas_src>
import jax
import jax.numpy as jnp
from jax.experimental import pallas as pl
from jax.experimental.pallas import tpu as pltpu

# Small but TPU-friendly sizes.
B = 16      # batch per triplet member (multiple of 16 = bf16 sublane tile)
D_IN = 128  # input feature dim   (multiple of 128 -> full MXU K dim)
H = 128     # hidden dim          (multiple of 128)
E = 128     # embedding dim       (multiple of 128 -> lane-dense output stores)
TB = 16     # rows per grid step on the fused (3B) batch axis


def _embed_kernel(x_ref, w1_ref, b1_ref, w2_ref, b2_ref, o_ref):
    """Shared embedding net on one batch tile: Linear -> ReLU -> Linear.

    bf16 operands feed the MXU; accumulation and the bias/ReLU epilogue are f32.
    """
    h = jnp.dot(x_ref[...], w1_ref[...], preferred_element_type=jnp.float32)
    h = jnp.maximum(h + b1_ref[...], 0.0)
    y = jnp.dot(h.astype(jnp.bfloat16), w2_ref[...],
                preferred_element_type=jnp.float32)
    o_ref[...] = (y + b2_ref[...]).astype(o_ref.dtype)


def _embed_pallas(x, params):
    """Run the embedding net on an (N, D_IN) slab; N must be a multiple of TB."""
    w1, b1, w2, b2 = params
    n = x.shape[0]
    assert n % TB == 0, "batch slab must be a multiple of the sublane tile (16)"

    def _full(shape):
        # Weights/biases: whole array resident; same block index every grid
        # step, so Pallas keeps them in VMEM (no re-DMA across steps).
        return pl.BlockSpec(shape, lambda i: (0, 0))

    return pl.pallas_call(
        _embed_kernel,
        out_shape=jax.ShapeDtypeStruct((n, E), jnp.float32),
        grid=(n // TB,),
        in_specs=[
            pl.BlockSpec((TB, D_IN), lambda i: (i, 0)),   # batch-tiled input
            _full((D_IN, H)), _full((1, H)),
            _full((H, E)),    _full((1, E)),
        ],
        out_specs=pl.BlockSpec((TB, E), lambda i: (i, 0)),  # lane-dense slab
        compiler_params=pltpu.CompilerParams(
            # Shards batch tiles across both TensorCores on v7x; no-op on
            # v5e/v6e (single TC).
            dimension_semantics=("parallel",)),
    )(x.astype(jnp.bfloat16), w1, b1, w2, b2)


def triplet_net(x1, x2, x3, params):
    """Pallas implementation of TripletNet.forward(x1, x2, x3)."""
    b = x1.shape[0]
    assert b % TB == 0, "batch must be a multiple of 16 (bf16 sublane tile)"
    # One fused (3B, D_IN) input slab in, one fused (3B, E) output slab out
    # (single output DMA stream, full-width stores); slice back in the wrapper.
    x = jnp.concatenate([x1, x2, x3], axis=0)
    y = _embed_pallas(x, params)
    return y[:b], y[b:2 * b], y[2 * b:]


def get_embedding(x, params):
    """Pallas implementation of TripletNet.get_embedding(x) (single pass)."""
    return _embed_pallas(x, params)


def init_params(key):
    k1, k2, k3, k4 = jax.random.split(key, 4)
    # nn.Linear-style weights, pre-transposed so the kernel does x @ W + b.
    # Matmul operands in bf16 (MXU fast path on v6e/v7x); biases stay f32.
    w1 = (jax.random.normal(k1, (D_IN, H), jnp.float32) * 0.1).astype(jnp.bfloat16)
    b1 = jax.random.normal(k2, (1, H), jnp.float32) * 0.1
    w2 = (jax.random.normal(k3, (H, E), jnp.float32) * 0.1).astype(jnp.bfloat16)
    b2 = jax.random.normal(k4, (1, E), jnp.float32) * 0.1
    return (w1, b1, w2, b2)


if __name__ == "__main__":
    key = jax.random.PRNGKey(0)
    kp, kx1, kx2, kx3 = jax.random.split(key, 4)

    params = init_params(kp)
    x1 = jax.random.normal(kx1, (B, D_IN), jnp.float32)
    x2 = jax.random.normal(kx2, (B, D_IN), jnp.float32)
    x3 = jax.random.normal(kx3, (B, D_IN), jnp.float32)

    o1, o2, o3 = triplet_net(x1, x2, x3, params)
    emb = get_embedding(x1, params)
    jax.block_until_ready((o1, o2, o3, emb))

    # Plain-JAX reference of the same (bf16-operand, f32-accumulate) net.
    def ref_embed(x):
        w1, b1, w2, b2 = params
        h = jnp.dot(x.astype(jnp.bfloat16), w1,
                    preferred_element_type=jnp.float32) + b1
        h = jnp.maximum(h, 0.0)
        return jnp.dot(h.astype(jnp.bfloat16), w2,
                       preferred_element_type=jnp.float32) + b2

    assert o1.shape == (B, E) and o2.shape == (B, E) and o3.shape == (B, E)
    assert emb.shape == (B, E)
    assert jnp.allclose(o1, ref_embed(x1), atol=1e-3, rtol=1e-3)
    assert jnp.allclose(o2, ref_embed(x2), atol=1e-3, rtol=1e-3)
    assert jnp.allclose(o3, ref_embed(x3), atol=1e-3, rtol=1e-3)
    assert jnp.allclose(emb, ref_embed(x1), atol=1e-3, rtol=1e-3)

    print("KERNEL_OK")
</pallas_src>

<mosaic_0001>
module attributes {stable_mosaic.version = 11 : i64} {
  func.func @_embed_kernel(%arg0: i32, %arg1: memref<16x128xbf16, #tpu.memory_space<vmem>>, %arg2: memref<128x128xbf16, #tpu.memory_space<vmem>>, %arg3: memref<1x128xf32, #tpu.memory_space<vmem>>, %arg4: memref<128x128xbf16, #tpu.memory_space<vmem>>, %arg5: memref<1x128xf32, #tpu.memory_space<vmem>>, %arg6: memref<16x128xf32, #tpu.memory_space<vmem>>) attributes {dimension_semantics = [#tpu.dimension_semantics<parallel>], iteration_bounds = array<i64: 3>, scalar_prefetch = 0 : i64, scratch_operands = 0 : i64, tpu.core_type = #tpu.core_type<tc>, window_params = [{transform_indices = @transform_0, window_bounds = array<i64: 16, 128>}, {pipeline_mode = #tpu.pipeline_mode<synchronous>, transform_indices = @transform_1, window_bounds = array<i64: 128, 128>}, {pipeline_mode = #tpu.pipeline_mode<synchronous>, transform_indices = @transform_2, window_bounds = array<i64: 1, 128>}, {pipeline_mode = #tpu.pipeline_mode<synchronous>, transform_indices = @transform_3, window_bounds = array<i64: 128, 128>}, {pipeline_mode = #tpu.pipeline_mode<synchronous>, transform_indices = @transform_4, window_bounds = array<i64: 1, 128>}, {transform_indices = @transform_5, window_bounds = array<i64: 16, 128>}]} {
    %c0 = arith.constant 0 : index
    %c0_0 = arith.constant 0 : index
    %0 = vector.load %arg1[%c0, %c0_0] : memref<16x128xbf16, #tpu.memory_space<vmem>>, vector<16x128xbf16>
    %c0_1 = arith.constant 0 : index
    %c0_2 = arith.constant 0 : index
    %1 = vector.load %arg2[%c0_1, %c0_2] : memref<128x128xbf16, #tpu.memory_space<vmem>>, vector<128x128xbf16>
    %cst = arith.constant dense<0.000000e+00> : vector<16x128xf32>
    %2 = tpu.matmul %0, %1, %cst {dimension_numbers = #tpu.dot_dimension_numbers<[1], [0], [0], [1], [0, 0, 1, 1], [], []>} : vector<16x128xbf16>, vector<128x128xbf16>, vector<16x128xf32> -> vector<16x128xf32>
    %c0_3 = arith.constant 0 : index
    %c0_4 = arith.constant 0 : index
    %3 = vector.load %arg3[%c0_3, %c0_4] : memref<1x128xf32, #tpu.memory_space<vmem>>, vector<1x128xf32>
    %4 = vector.broadcast %3 : vector<1x128xf32> to vector<16x128xf32>
    %5 = arith.addf %2, %4 : vector<16x128xf32>
    %cst_5 = arith.constant 0.000000e+00 : f32
    %6 = vector.broadcast %cst_5 : f32 to vector<16x128xf32>
    %7 = arith.maximumf %5, %6 : vector<16x128xf32>
    %8 = arith.truncf %7 : vector<16x128xf32> to vector<16x128xbf16>
    %c0_6 = arith.constant 0 : index
    %c0_7 = arith.constant 0 : index
    %9 = vector.load %arg4[%c0_6, %c0_7] : memref<128x128xbf16, #tpu.memory_space<vmem>>, vector<128x128xbf16>
    %cst_8 = arith.constant dense<0.000000e+00> : vector<16x128xf32>
    %10 = tpu.matmul %8, %9, %cst_8 {dimension_numbers = #tpu.dot_dimension_numbers<[1], [0], [0], [1], [0, 0, 1, 1], [], []>} : vector<16x128xbf16>, vector<128x128xbf16>, vector<16x128xf32> -> vector<16x128xf32>
    %c0_9 = arith.constant 0 : index
    %c0_10 = arith.constant 0 : index
    %11 = vector.load %arg5[%c0_9, %c0_10] : memref<1x128xf32, #tpu.memory_space<vmem>>, vector<1x128xf32>
    %12 = vector.broadcast %11 : vector<1x128xf32> to vector<16x128xf32>
    %13 = arith.addf %10, %12 : vector<16x128xf32>
    %c0_11 = arith.constant 0 : index
    %c0_12 = arith.constant 0 : index
    %14 = vector.load %arg6[%c0_11, %c0_12] : memref<16x128xf32, #tpu.memory_space<vmem>>, vector<16x128xf32>
    tpu.vector_store %arg6[%c0_11, %c0_12], %13 {strides = array<i32>} : memref<16x128xf32, #tpu.memory_space<vmem>>, vector<16x128xf32>,
    return
  }
  func.func @transform_0(%arg0: i32) -> (i32, i32) {
    %c0_i32 = arith.constant 0 : i32
    %c0_i32_0 = arith.constant 0 : i32
    return %arg0, %c0_i32 : i32, i32
  }
  func.func @transform_1(%arg0: i32) -> (i32, i32) {
    %c0_i32 = arith.constant 0 : i32
    %c0_i32_0 = arith.constant 0 : i32
    %c0_i32_1 = arith.constant 0 : i32
    return %c0_i32, %c0_i32_0 : i32, i32
  }
  func.func @transform_2(%arg0: i32) -> (i32, i32) {
    %c0_i32 = arith.constant 0 : i32
    %c0_i32_0 = arith.constant 0 : i32
    %c0_i32_1 = arith.constant 0 : i32
    return %c0_i32, %c0_i32_0 : i32, i32
  }
  func.func @transform_3(%arg0: i32) -> (i32, i32) {
    %c0_i32 = arith.constant 0 : i32
    %c0_i32_0 = arith.constant 0 : i32
    %c0_i32_1 = arith.constant 0 : i32
    return %c0_i32, %c0_i32_0 : i32, i32
  }
  func.func @transform_4(%arg0: i32) -> (i32, i32) {
    %c0_i32 = arith.constant 0 : i32
    %c0_i32_0 = arith.constant 0 : i32
    %c0_i32_1 = arith.constant 0 : i32
    return %c0_i32, %c0_i32_0 : i32, i32
  }
  func.func @transform_5(%arg0: i32) -> (i32, i32) {
    %c0_i32 = arith.constant 0 : i32
    %c0_i32_0 = arith.constant 0 : i32
    return %arg0, %c0_i32 : i32, i32
  }
}

</mosaic_0001>

<llo_original>
// kernel: tpu_custom_call.1
$region0: #{tpu_custom_call.1}
  #allocation0 [shape = 'u32[]', space=smem, size = 0x4, offset = 0x4, fixed_abs, tag = 'smem constant byte address 0x4 - core index']
  #allocation1 [shape = 'u32[144,128]{1,0:T(1,128)}', space=vmem, size = 0x12000, scoped, tag = 'internal scratch']
  %s0 = inlined_call_operand.hbm [shape: bf16[48,128], index: 0, kind: input, shape index: {}]
  %s1 = inlined_call_operand.hbm [shape: bf16[128,128], index: 1, kind: input, shape index: {}]
  %s2 = inlined_call_operand.vmem [shape: f32[1,128], index: 2, kind: input, shape index: {}]
  %s3 = inlined_call_operand.hbm [shape: bf16[128,128], index: 3, kind: input, shape index: {}]
  %s4 = inlined_call_operand.vmem [shape: f32[1,128], index: 4, kind: input, shape index: {}]
  %s5 = inlined_call_operand.hbm [shape: f32[48,128], index: 5, kind: output, shape index: {}]
  %s6 = sld [smem:[#allocation0]]
  $region65: #{tpu_custom_call.1} parent=0
    _
  %s8 = ssub.s32 1, %s6
  %s9 = scalar_select 0, %s8, %s6
  $region1: #{tpu_custom_call.1} parent=0
    #allocation2 [shape = 'u8[8192]{0}', space=vmem, size = 0x2000, scoped, tag = 'input window, operand 0']
    #allocation3 [shape = 's32[2]{0}', space=sflag, size = 0x8, scoped, tag = 'scoped memory for tpu_custom_call.1']
    #allocation4 [shape = 's32[2]{0}', space=sflag, size = 0x8, scoped, tag = 'scoped memory for tpu_custom_call.1']
    #allocation5 [shape = 'u8[32768]{0}', space=vmem, size = 0x8000, scoped, tag = 'input window, operand 1, single buffered']
    #allocation6 [shape = 's32[1]{0}', space=sflag, size = 0x4, scoped, tag = 'scoped memory for tpu_custom_call.1']
    #allocation7 [shape = 'u8[32768]{0}', space=vmem, size = 0x8000, scoped, tag = 'input window, operand 3, single buffered']
    #allocation8 [shape = 'u8[16384]{0}', space=vmem, size = 0x4000, scoped, tag = 'output window, operand 0']
    %10 = vsyncpa [#allocation3], 0
    %s11 = scalar_lea.sflag [#allocation3], 1
    %12 = vsyncpa %s11, 0
    %13 = vsyncpa [#allocation6], 0
    %14 = vsyncpa [#allocation4], 0
    %s15 = scalar_lea.sflag [#allocation4], 1
    %16 = vsyncpa %s15, 0
    loop: start=0, step=1, limit=5
    $region2: #{tpu_custom_call.1} parent=1 // loop_pre_header
      _
    $region3: #{tpu_custom_call.1} parent=1 // loop_header
      %s18 = sphi 0, %s22
      %p19 = scmp.ge.s32.totalorder %s18, 5
      %s28 = sphi 0, %s30
      %s31 = sphi 0, %s28
      %s32 = sphi 0, %s31
      %s48 = sphi 0, %s32
      %s52 = sphi 0, %s52
      %s54 = sphi 0, %s52
      %s55 = sphi 0, %s54
      %s69 = sphi 0, %s55
      %s73 = sphi 0, %s73
      %s75 = sphi 0, %s73
      %s76 = sphi 0, %s75
      %s90 = sphi 0, %s76
      %s94 = sphi 0, %s94
      %s96 = sphi 0, %s94
      %s97 = sphi 0, %s96
      %s111 = sphi 0, %s97
      %s115 = sphi 0, %s115
      %s117 = sphi 0, %s115
      %s118 = sphi 0, %s117
      %s132 = sphi 0, %s118
      %s138 = sphi 0, %s140
      %s141 = sphi 0, %s138
      %s142 = sphi 0, %s141
      %s158 = sphi 0, %s142
    $region4: #{tpu_custom_call.1} parent=1 // loop_header_branch
      %21 = sbr.rel (%p19) target = $region8
    $region5: #{tpu_custom_call.1} parent=1 // loop_body
      %s23 = ssub.s32 %s18, 1
      %s24 = ssub.s32 %s18, 2
      %s25 = sadd.s32 %s18, 1
      %s26 = ssub.s32 %s18, %s25
      %p27 = scmp.eq.s32.totalorder %s26, 0
      %s29 = sadd.s32 %s28, 1
      %s30 = scalar_select %p27, %s28, %s29
      %p33 = pneg %p27
      %p34 = scmp.eq.s32.totalorder %s18, 2
      %p35 = por %p33, %p34
      %p36 = scmp.ne.s32.totalorder %s28, %s31
      %p37 = scmp.eq.s32.totalorder %s18, 0
      %p38 = por %p36, %p37
      %p39 = scmp.ne.s32.totalorder %s28, %s31
      %p40 = scmp.eq.s32.totalorder %s23, 2
      %p41 = por %p39, %p40
      %p42 = scmp.ne.s32.totalorder %s31, %s32
      %p43 = scmp.eq.s32.totalorder %s23, 0
      %p44 = por %p42, %p43
      %p45 = scmp.ne.s32.totalorder %s31, %s32
      %p46 = scmp.eq.s32.totalorder %s24, 2
      %p47 = por %p45, %p46
      %p49 = scmp.ne.s32.totalorder %s32, %s48
      %p50 = scmp.eq.s32.totalorder %s24, 0
      %p51 = por %p49, %p50
      %s53 = sadd.s32 %s52, 1
      %p56 = scmp.eq.s32.totalorder %s18, 2
      %p57 = scmp.ne.s32.totalorder %s52, %s54
      %p58 = scmp.eq.s32.totalorder %s18, 0
      %p59 = por %p57, %p58
      %p60 = scmp.ne.s32.totalorder %s52, %s54
      %p61 = scmp.eq.s32.totalorder %s23, 2
      %p62 = por %p60, %p61
      %p63 = scmp.ne.s32.totalorder %s54, %s55
      %p64 = scmp.eq.s32.totalorder %s23, 0
      %p65 = por %p63, %p64
      %p66 = scmp.ne.s32.totalorder %s54, %s55
      %p67 = scmp.eq.s32.totalorder %s24, 2
      %p68 = por %p66, %p67
      %p70 = scmp.ne.s32.totalorder %s55, %s69
      %p71 = scmp.eq.s32.totalorder %s24, 0
      %p72 = por %p70, %p71
      %s74 = sadd.s32 %s73, 1
      %p77 = scmp.eq.s32.totalorder %s18, 2
      %p78 = scmp.ne.s32.totalorder %s73, %s75
      %p79 = scmp.eq.s32.totalorder %s18, 0
      %p80 = por %p78, %p79
      %p81 = scmp.ne.s32.totalorder %s73, %s75
      %p82 = scmp.eq.s32.totalorder %s23, 2
      %p83 = por %p81, %p82
      %p84 = scmp.ne.s32.totalorder %s75, %s76
      %p85 = scmp.eq.s32.totalorder %s23, 0
      %p86 = por %p84, %p85
      %p87 = scmp.ne.s32.totalorder %s75, %s76
      %p88 = scmp.eq.s32.totalorder %s24, 2
      %p89 = por %p87, %p88
      %p91 = scmp.ne.s32.totalorder %s76, %s90
      %p92 = scmp.eq.s32.totalorder %s24, 0
      %p93 = por %p91, %p92
      %s95 = sadd.s32 %s94, 1
      %p98 = scmp.eq.s32.totalorder %s18, 2
      %p99 = scmp.ne.s32.totalorder %s94, %s96
      %p100 = scmp.eq.s32.totalorder %s18, 0
      %p101 = por %p99, %p100
      %p102 = scmp.ne.s32.totalorder %s94, %s96
      %p103 = scmp.eq.s32.totalorder %s23, 2
      %p104 = por %p102, %p103
      %p105 = scmp.ne.s32.totalorder %s96, %s97
      %p106 = scmp.eq.s32.totalorder %s23, 0
      %p107 = por %p105, %p106
      %p108 = scmp.ne.s32.totalorder %s96, %s97
      %p109 = scmp.eq.s32.totalorder %s24, 2
      %p110 = por %p108, %p109
      %p112 = scmp.ne.s32.totalorder %s97, %s111
      %p113 = scmp.eq.s32.totalorder %s24, 0
      %p114 = por %p112, %p113
      %s116 = sadd.s32 %s115, 1
      %p119 = scmp.eq.s32.totalorder %s18, 2
      %p120 = scmp.ne.s32.totalorder %s115, %s117
      %p121 = scmp.eq.s32.totalorder %s18, 0
      %p122 = por %p120, %p121
      %p123 = scmp.ne.s32.totalorder %s115, %s117
      %p124 = scmp.eq.s32.totalorder %s23, 2
      %p125 = por %p123, %p124
      %p126 = scmp.ne.s32.totalorder %s117, %s118
      %p127 = scmp.eq.s32.totalorder %s23, 0
      %p128 = por %p126, %p127
      %p129 = scmp.ne.s32.totalorder %s117, %s118
      %p130 = scmp.eq.s32.totalorder %s24, 2
      %p131 = por %p129, %p130
      %p133 = scmp.ne.s32.totalorder %s118, %s132
      %p134 = scmp.eq.s32.totalorder %s24, 0
      %p135 = por %p133, %p134
      %s136 = ssub.s32 %s18, %s25
      %p137 = scmp.eq.s32.totalorder %s136, 0
      %s139 = sadd.s32 %s138, 1
      %s140 = scalar_select %p137, %s138, %s139
      %p143 = pneg %p137
      %p144 = scmp.eq.s32.totalorder %s18, 2
      %p145 = por %p143, %p144
      %p146 = scmp.ne.s32.totalorder %s138, %s141
      %p147 = scmp.eq.s32.totalorder %s18, 0
      %p148 = por %p146, %p147
      %p149 = scmp.ne.s32.totalorder %s138, %s141
      %p150 = scmp.eq.s32.totalorder %s23, 2
      %p151 = por %p149, %p150
      %p152 = scmp.ne.s32.totalorder %s141, %s142
      %p153 = scmp.eq.s32.totalorder %s23, 0
      %p154 = por %p152, %p153
      %p155 = scmp.ne.s32.totalorder %s141, %s142
      %p156 = scmp.eq.s32.totalorder %s24, 2
      %p157 = por %p155, %p156
      %p159 = scmp.ne.s32.totalorder %s142, %s158
      %p160 = scmp.eq.s32.totalorder %s24, 0
      %p161 = por %p159, %p160
      %p162 = scmp.le.s32.totalorder 1, %s18
      %p163 = scmp.lt.s32.totalorder %s18, 4
      %p164 = pnand %p162, %p163
      %p165 = pneg %p164
      // Predicated region
      $region9: #{tpu_custom_call.1} parent=5 // pred_check
        _
      $region10: #{tpu_custom_call.1} parent=5 // pred_check_branch
        %167 = sbr.rel (%p164) target = $region12
      $region11: #{tpu_custom_call.1} parent=5 // pred_region
        %s168 = ssub.s32 %s18, 1
        // Predicated region
        $region13: #{tpu_custom_call.1} parent=11 // pred_check
          %p169 = pneg %p65
        $region14: #{tpu_custom_call.1} parent=11 // pred_check_branch
          %171 = sbr.rel (%p169) target = $region16
        $region15: #{tpu_custom_call.1} parent=11 // pred_region
          %s173 = ssub.s32 1024, 1024
          %174 = vsyncadd [#allocation6], %s173
          %s175 = sshll.u32 [#allocation5], 4
          %s176 = int_to_ptr.vmem [resolvable:$true] %s175
          %181 = dma.hbm_to_vmem [thread:$0]  %s1, 1024, %s176, [#allocation6], 64, 64, 4
        $region16: #{tpu_custom_call.1} parent=11 // pred_fallthru
          _
        // Predicated region
        $region17: #{tpu_custom_call.1} parent=11 // pred_check
          %p182 = pneg %p86
        $region18: #{tpu_custom_call.1} parent=11 // pred_check_branch
          %184 = sbr.rel (%p182) target = $region20
        $region19: #{tpu_custom_call.1} parent=11 // pred_region
          _
        $region20: #{tpu_custom_call.1} parent=11 // pred_fallthru
          _
        // Predicated region
        $region21: #{tpu_custom_call.1} parent=11 // pred_check
          %p185 = pneg %p107
        $region22: #{tpu_custom_call.1} parent=11 // pred_check_branch
          %187 = sbr.rel (%p185) target = $region24
        $region23: #{tpu_custom_call.1} parent=11 // pred_region
          %s189 = ssub.s32 1024, 1024
          %190 = vsyncadd [#allocation6], %s189
          %s191 = sshll.u32 [#allocation7], 4
          %s192 = int_to_ptr.vmem [resolvable:$true] %s191
          %197 = dma.hbm_to_vmem [thread:$0]  %s3, 1024, %s192, [#allocation6], 64, 64, 4
        $region24: #{tpu_custom_call.1} parent=11 // pred_fallthru
          _
        // Predicated region
        $region25: #{tpu_custom_call.1} parent=11 // pred_check
          %p198 = pneg %p128
        $region26: #{tpu_custom_call.1} parent=11 // pred_check_branch
          %200 = sbr.rel (%p198) target = $region28
        $region27: #{tpu_custom_call.1} parent=11 // pred_region
          _
        $region28: #{tpu_custom_call.1} parent=11 // pred_fallthru
          _
      $region12: #{tpu_custom_call.1} parent=5 // pred_fallthru
        _
      %p201 = scmp.lt.s32.totalorder %s18, 3
      // Predicated region
      $region29: #{tpu_custom_call.1} parent=5 // pred_check
        %p202 = pneg %p201
      $region30: #{tpu_custom_call.1} parent=5 // pred_check_branch
        %204 = sbr.rel (%p202) target = $region32
      $region31: #{tpu_custom_call.1} parent=5 // pred_region
        // Predicated region
        $region33: #{tpu_custom_call.1} parent=31 // pred_check
          %p205 = pneg %p38
        $region34: #{tpu_custom_call.1} parent=31 // pred_check_branch
          %207 = sbr.rel (%p205) target = $region36
        $region35: #{tpu_custom_call.1} parent=31 // pred_region
          %s208 = sand.u32 %s28, 1
          %s209 = scalar_lea.sflag [#allocation3], %s208
          %s210 = sand.u32 %s28, 1
          %s211 = smul.addr %s210, 8
          %s212 = scalar_lea.vmem [#allocation2], %s211
          %s213 = smul.u32 2, %s18
          %s215 = ssub.s32 128, 128
          %216 = vsyncadd %s209, %s215
          %s217 = smul.addr %s213, 64
          %s218 = scalar_lea.hbm %s0, %s217
          %s219 = sshll.u32 %s212, 4
          %s220 = int_to_ptr.vmem [resolvable:$true] %s219
          %225 = dma.hbm_to_vmem [thread:$0]  %s218, 128, %s220, %s209, 64, 64, 4
        $region36: #{tpu_custom_call.1} parent=31 // pred_fallthru
          _
      $region32: #{tpu_custom_call.1} parent=5 // pred_fallthru
        _
      %p226 = scmp.le.s32.totalorder 1, %s18
      %p227 = scmp.lt.s32.totalorder %s18, 4
      %p228 = pnand %p226, %p227
      %p229 = pneg %p228
      // Predicated region
      $region37: #{tpu_custom_call.1} parent=5 // pred_check
        _
      $region38: #{tpu_custom_call.1} parent=5 // pred_check_branch
        %231 = sbr.rel (%p228) target = $region40
      $region39: #{tpu_custom_call.1} parent=5 // pred_region
        %s232 = ssub.s32 %s18, 1
        %s233 = sand.u32 %s31, 1
        %s234 = scalar_lea.sflag [#allocation3], %s233
        %s235 = sand.u32 %s31, 1
        %s236 = smul.addr %s235, 8
        %s237 = scalar_lea.vmem [#allocation2], %s236
        // Predicated region
        $region41: #{tpu_custom_call.1} parent=39 // pred_check
          %p238 = pneg %p44
        $region42: #{tpu_custom_call.1} parent=39 // pred_check_branch
          %240 = sbr.rel (%p238) target = $region44
        $region43: #{tpu_custom_call.1} parent=39 // pred_region
          %241 = dma.done %s234, 128
        $region44: #{tpu_custom_call.1} parent=39 // pred_fallthru
          _
        // Predicated region
        $region45: #{tpu_custom_call.1} parent=39 // pred_check
          %p242 = pneg %p65
        $region46: #{tpu_custom_call.1} parent=39 // pred_check_branch
          %244 = sbr.rel (%p242) target = $region48
        $region47: #{tpu_custom_call.1} parent=39 // pred_region
          %245 = dma.done [#allocation6], 1024
        $region48: #{tpu_custom_call.1} parent=39 // pred_fallthru
          _
        // Predicated region
        $region49: #{tpu_custom_call.1} parent=39 // pred_check
          %p246 = pneg %p107
        $region50: #{tpu_custom_call.1} parent=39 // pred_check_branch
          %248 = sbr.rel (%p246) target = $region52
        $region51: #{tpu_custom_call.1} parent=39 // pred_region
          %249 = dma.done [#allocation6], 1024
        $region52: #{tpu_custom_call.1} parent=39 // pred_fallthru
          _
        %s250 = sand.u32 %s31, 1
        %s251 = scalar_lea.sflag [#allocation3], %s250
        %s252 = sand.u32 %s31, 1
        %s253 = smul.addr %s252, 8
        %s254 = scalar_lea.vmem [#allocation2], %s253
        %p255 = pneg %p44
        %p256 = pneg %p41
        %p257 = pneg %p65
        %p258 = pneg %p62
        %p259 = pneg %p86
        %p260 = pneg %p83
        %p261 = pneg %p107
        %p262 = pneg %p104
        %p263 = pneg %p128
        %p264 = pneg %p125
        %p265 = pneg %p154
        %p266 = pneg %p151
        %s267 = sand.u32 %s141, 1
        %s268 = scalar_lea.sflag [#allocation4], %s267
        %s269 = sand.u32 %s141, 1
        %s270 = smul.addr %s269, 16
        %s271 = scalar_lea.vmem [#allocation8], %s270
        %s272 = smul.u32 2, %s23
        %s273 = smul.u32 2, %s23
        %v275 = vld [vmem:[%s237] sm:$0xf]
        %v276 = vld [vmem:[%s237 + $0x4] sm:$0xf]
        %v277 = vld [vmem:[#allocation5] sm:$0xf]
        %v278 = vld [vmem:[#allocation5 + $0x4] sm:$0xf]
        %v279 = vld [vmem:[#allocation5 + $0x8] sm:$0xf]
        %v280 = vld [vmem:[#allocation5 + $0xc] sm:$0xf]
        %v281 = vld [vmem:[#allocation5 + $0x10] sm:$0xf]
        %v282 = vld [vmem:[#allocation5 + $0x14] sm:$0xf]
        %v283 = vld [vmem:[#allocation5 + $0x18] sm:$0xf]
        %v284 = vld [vmem:[#allocation5 + $0x1c] sm:$0xf]
        %v285 = vld [vmem:[#allocation5 + $0x20] sm:$0xf]
        %v286 = vld [vmem:[#allocation5 + $0x24] sm:$0xf]
        %v287 = vld [vmem:[#allocation5 + $0x28] sm:$0xf]
        %v288 = vld [vmem:[#allocation5 + $0x2c] sm:$0xf]
        %v289 = vld [vmem:[#allocation5 + $0x30] sm:$0xf]
        %v290 = vld [vmem:[#allocation5 + $0x34] sm:$0xf]
        %v291 = vld [vmem:[#allocation5 + $0x38] sm:$0xf]
        %v292 = vld [vmem:[#allocation5 + $0x3c] sm:$0xf]
        %v293 = vld [vmem:[%s2] sm:$0x1]
        %v295 = vlaneseq
        %v296 = vshrl.u32 %v295, 7
        %v297 = vsub.s32 0, %v296
        %v298 = vrot.slane %v293, %v297
        %v302 = vunpack.c.l.b16 %v275
        %v303 = vunpack.c.l.b16 %v276
        %v304 = vpack.c.b16 %v303, %v302
        %v322 = vunpack.c.l.b16 %v277
        %v323 = vunpack.c.l.b16 %v278
        %v324 = vunpack.c.l.b16 %v279
        %v325 = vunpack.c.l.b16 %v280
        %v326 = vunpack.c.l.b16 %v281
        %v327 = vunpack.c.l.b16 %v282
        %v328 = vunpack.c.l.b16 %v283
        %v329 = vunpack.c.l.b16 %v284
        %v330 = vunpack.c.l.b16 %v285
        %v331 = vunpack.c.l.b16 %v286
        %v332 = vunpack.c.l.b16 %v287
        %v333 = vunpack.c.l.b16 %v288
        %v334 = vunpack.c.l.b16 %v289
        %v335 = vunpack.c.l.b16 %v290
        %v336 = vunpack.c.l.b16 %v291
        %v337 = vunpack.c.l.b16 %v292
        %v338 = vpack.c.b16 %v323, %v322
        %v339 = vpack.c.b16 %v325, %v324
        %v340 = vpack.c.b16 %v327, %v326
        %v341 = vpack.c.b16 %v329, %v328
        %v342 = vpack.c.b16 %v331, %v330
        %v343 = vpack.c.b16 %v333, %v332
        %v344 = vpack.c.b16 %v335, %v334
        %v345 = vpack.c.b16 %v337, %v336
        %354 = vmatprep.subr.bf16.mxu0 0
        %355 = vmatpush1.bf16.msra.mxu0 %v345
        %356 = vmatprep.subr.bf16.mxu0 0
        %357 = vmatpush1.bf16.msra.mxu0 %v344
        %358 = vmatprep.subr.bf16.mxu0 0
        %359 = vmatpush1.bf16.msra.mxu0 %v343
        %360 = vmatprep.subr.bf16.mxu0 0
        %361 = vmatpush1.bf16.msra.mxu0 %v342
        %362 = vmatprep.subr.bf16.mxu0 0
        %363 = vmatpush1.bf16.msra.mxu0 %v341
        %364 = vmatprep.subr.bf16.mxu0 0
        %365 = vmatpush1.bf16.msra.mxu0 %v340
        %366 = vmatprep.subr.bf16.mxu0 0
        %367 = vmatpush1.bf16.msra.mxu0 %v339
        %368 = vmatprep.subr.bf16.mxu0 0
        %369 = vmatpush1.bf16.msra.mxu0 %v338
        %370 = vmatprep.subr.bf16.mxu0 0
        %371 = vmatpush2.bf16.msra.mxu0 0
        %372 = vmatprep.subr.bf16.mxu0 0
        %373 = vmatpush2.bf16.msra.mxu0 0
        %374 = vmatprep.subr.bf16.mxu0 0
        %375 = vmatpush2.bf16.msra.mxu0 0
        %376 = vmatprep.subr.bf16.mxu0 0
        %377 = vmatpush2.bf16.msra.mxu0 0
        %378 = vmatprep.subr.bf16.mxu0 0
        %379 = vmatpush2.bf16.msra.mxu0 0
        %380 = vmatprep.subr.bf16.mxu0 0
        %381 = vmatpush2.bf16.msra.mxu0 0
        %382 = vmatprep.subr.bf16.mxu0 0
        %383 = vmatpush2.bf16.msra.mxu0 0
        %384 = vmatprep.subr.bf16.mxu0 0
        %385 = vmatpush2.bf16.msra.mxu0 0
        %386 = vmatprep.mubr.bf16.mxu0 0
        %387 = vmatmul.mubr.bf16.gmra.mxu0 %v304
        %v388 = vpop.f32.mrf.mxu0
        %v389 = vadd.f32 %v298, %v388
        %v390 = vpop.f32.mrf.mxu0
        %v391 = vpop.f32.mrf.mxu0
        %v392 = vadd.f32 %v298, %v391
        %v393 = vpop.f32.mrf.mxu0
        %394 = vdwg.mxu0
        %v395 = vmax.f32 %v389, 0.0
        %v396 = vmax.f32 %v392, 0.0
        %v397 = vpack.c.bf16 %v396, %v395
        %v398 = vld [vmem:[#allocation7] sm:$0xf]
        %v399 = vld [vmem:[#allocation7 + $0x4] sm:$0xf]
        %v400 = vld [vmem:[#allocation7 + $0x8] sm:$0xf]
        %v401 = vld [vmem:[#allocation7 + $0xc] sm:$0xf]
        %v402 = vld [vmem:[#allocation7 + $0x10] sm:$0xf]
        %v403 = vld [vmem:[#allocation7 + $0x14] sm:$0xf]
        %v404 = vld [vmem:[#allocation7 + $0x18] sm:$0xf]
        %v405 = vld [vmem:[#allocation7 + $0x1c] sm:$0xf]
        %v406 = vld [vmem:[#allocation7 + $0x20] sm:$0xf]
        %v407 = vld [vmem:[#allocation7 + $0x24] sm:$0xf]
        %v408 = vld [vmem:[#allocation7 + $0x28] sm:$0xf]
        %v409 = vld [vmem:[#allocation7 + $0x2c] sm:$0xf]
        %v410 = vld [vmem:[#allocation7 + $0x30] sm:$0xf]
        %v411 = vld [vmem:[#allocation7 + $0x34] sm:$0xf]
        %v412 = vld [vmem:[#allocation7 + $0x38] sm:$0xf]
        %v413 = vld [vmem:[#allocation7 + $0x3c] sm:$0xf]
        %v414 = vld [vmem:[%s4] sm:$0x1]
        %v416 = vlaneseq
        %v417 = vshrl.u32 %v416, 7
        %v418 = vsub.s32 0, %v417
        %v419 = vrot.slane %v414, %v418
        %v437 = vunpack.c.l.b16 %v398
        %v438 = vunpack.c.l.b16 %v399
        %v439 = vunpack.c.l.b16 %v400
        %v440 = vunpack.c.l.b16 %v401
        %v441 = vunpack.c.l.b16 %v402
        %v442 = vunpack.c.l.b16 %v403
        %v443 = vunpack.c.l.b16 %v404
        %v444 = vunpack.c.l.b16 %v405
        %v445 = vunpack.c.l.b16 %v406
        %v446 = vunpack.c.l.b16 %v407
        %v447 = vunpack.c.l.b16 %v408
        %v448 = vunpack.c.l.b16 %v409
        %v449 = vunpack.c.l.b16 %v410
        %v450 = vunpack.c.l.b16 %v411
        %v451 = vunpack.c.l.b16 %v412
        %v452 = vunpack.c.l.b16 %v413
        %v453 = vpack.c.b16 %v438, %v437
        %v454 = vpack.c.b16 %v440, %v439
        %v455 = vpack.c.b16 %v442, %v441
        %v456 = vpack.c.b16 %v444, %v443
        %v457 = vpack.c.b16 %v446, %v445
        %v458 = vpack.c.b16 %v448, %v447
        %v459 = vpack.c.b16 %v450, %v449
        %v460 = vpack.c.b16 %v452, %v451
        %469 = vmatprep.subr.bf16.mxu0 0
        %470 = vmatpush1.bf16.msra.mxu0 %v460
        %471 = vmatprep.subr.bf16.mxu0 0
        %472 = vmatpush1.bf16.msra.mxu0 %v459
        %473 = vmatprep.subr.bf16.mxu0 0
        %474 = vmatpush1.bf16.msra.mxu0 %v458
        %475 = vmatprep.subr.bf16.mxu0 0
        %476 = vmatpush1.bf16.msra.mxu0 %v457
        %477 = vmatprep.subr.bf16.mxu0 0
        %478 = vmatpush1.bf16.msra.mxu0 %v456
        %479 = vmatprep.subr.bf16.mxu0 0
        %480 = vmatpush1.bf16.msra.mxu0 %v455
        %481 = vmatprep.subr.bf16.mxu0 0
        %482 = vmatpush1.bf16.msra.mxu0 %v454
        %483 = vmatprep.subr.bf16.mxu0 0
        %484 = vmatpush1.bf16.msra.mxu0 %v453
        %485 = vmatprep.subr.bf16.mxu0 0
        %486 = vmatpush2.bf16.msra.mxu0 0
        %487 = vmatprep.subr.bf16.mxu0 0
        %488 = vmatpush2.bf16.msra.mxu0 0
        %489 = vmatprep.subr.bf16.mxu0 0
        %490 = vmatpush2.bf16.msra.mxu0 0
        %491 = vmatprep.subr.bf16.mxu0 0
        %492 = vmatpush2.bf16.msra.mxu0 0
        %493 = vmatprep.subr.bf16.mxu0 0
        %494 = vmatpush2.bf16.msra.mxu0 0
        %495 = vmatprep.subr.bf16.mxu0 0
        %496 = vmatpush2.bf16.msra.mxu0 0
        %497 = vmatprep.subr.bf16.mxu0 0
        %498 = vmatpush2.bf16.msra.mxu0 0
        %499 = vmatprep.subr.bf16.mxu0 0
        %500 = vmatpush2.bf16.msra.mxu0 0
        %501 = vmatprep.mubr.bf16.mxu0 0
        %502 = vmatmul.mubr.bf16.gmra.mxu0 %v397
        %v503 = vpop.f32.mrf.mxu0
        %v504 = vadd.f32 %v419, %v503
        %v505 = vpop.f32.mrf.mxu0
        %v506 = vpop.f32.mrf.mxu0
        %v507 = vadd.f32 %v419, %v506
        %v508 = vpop.f32.mrf.mxu0
        %509 = vdwg.mxu0
        %510 = vst [vmem:[%s271] sm:$0xff] %v504
        %511 = vst [vmem:[%s271 + $0x8] sm:$0xff] %v507
        %s512 = sand.u32 %s141, 1
        %s513 = scalar_lea.sflag [#allocation4], %s512
        %s514 = sand.u32 %s141, 1
        %s515 = smul.addr %s514, 16
        %s516 = scalar_lea.vmem [#allocation8], %s515
        // Predicated region
        $region53: #{tpu_custom_call.1} parent=39 // pred_check
          %p517 = pneg %p151
        $region54: #{tpu_custom_call.1} parent=39 // pred_check_branch
          %519 = sbr.rel (%p517) target = $region56
        $region55: #{tpu_custom_call.1} parent=39 // pred_region
          %s520 = smul.u32 2, %s23
          %s522 = ssub.s32 256, 256
          %523 = vsyncadd %s513, %s522
          %s524 = smul.addr %s520, 128
          %s525 = scalar_lea.hbm %s5, %s524
          %s526 = sshll.u32 %s516, 4
          %s527 = int_to_ptr.vmem [resolvable:$true] %s526
          %532 = dma.vmem_to_hbm [thread:$0]  %s527, 256, %s525, %s513, 128, 128, 8
        $region56: #{tpu_custom_call.1} parent=39 // pred_fallthru
          _
      $region40: #{tpu_custom_call.1} parent=5 // pred_fallthru
        _
      %p533 = scmp.le.s32.totalorder 2, %s18
      // Predicated region
      $region57: #{tpu_custom_call.1} parent=5 // pred_check
        %p534 = pneg %p533
      $region58: #{tpu_custom_call.1} parent=5 // pred_check_branch
        %536 = sbr.rel (%p534) target = $region60
      $region59: #{tpu_custom_call.1} parent=5 // pred_region
        %s537 = ssub.s32 %s18, 2
        // Predicated region
        $region61: #{tpu_custom_call.1} parent=59 // pred_check
          %p538 = pneg %p157
        $region62: #{tpu_custom_call.1} parent=59 // pred_check_branch
          %540 = sbr.rel (%p538) target = $region64
        $region63: #{tpu_custom_call.1} parent=59 // pred_region
          %s541 = sand.u32 %s142, 1
          %s542 = scalar_lea.sflag [#allocation4], %s541
          %s543 = sand.u32 %s142, 1
          %s544 = smul.addr %s543, 16
          %s545 = scalar_lea.vmem [#allocation8], %s544
          %546 = dma.done %s542, 256
        $region64: #{tpu_custom_call.1} parent=59 // pred_fallthru
          _
      $region60: #{tpu_custom_call.1} parent=5 // pred_fallthru
        _
    $region6: #{tpu_custom_call.1} parent=1 // loop_footer
      %s22 = sadd.s32 1, %s18
    $region7: #{tpu_custom_call.1} parent=1 // loop_footer_branch
      %17 = sbr.rel target = $region3
    $region8: #{tpu_custom_call.1} parent=1 // loop_exit
      _
    %547 = vsyncpa [#allocation3], 1
    %s548 = scalar_lea.sflag [#allocation3], 1
    %549 = vsyncpa %s548, 1
    %550 = vsyncpa [#allocation6], 1
    %551 = vsyncpa [#allocation4], 1
    %s552 = scalar_lea.sflag [#allocation4], 1
    %553 = vsyncpa %s552, 1

</llo_original>
